<compile_context>
chip_gen: v5e
topology: v5e:2x2
jax: 0.10.0
libtpu: 0.0.40
codegen_flags: <defaults>
</compile_context>

<pallas_src>
import functools

import jax
import jax.numpy as jnp
from jax import lax
from jax.experimental import pallas as pl
from jax.experimental.pallas import tpu as pltpu

H1 = 128          # first hidden width per head
H2 = 64           # second hidden width per head
OUT_LANES = 128   # packed, lane-dense output width (actor | critic | pad)
MAX_TILE_B = 4096 # upper bound on rows per grid step (reviewed: sweep 1-4K)


def _round_up(x, m):
    return (x + m - 1) // m * m


def actor_critic_kernel(x_ref, w1_ref, b1_ref, w2_ref, b2_ref, w3_ref, b3_ref,
                        out_ref, *, output_dim):
    x = x_ref[...]

    # Fused layer 1: [TILE_B, in] @ [in, 256] -> [actor h1(128) | critic h1(128)]
    h = jnp.dot(x, w1_ref[...], preferred_element_type=jnp.float32) + b1_ref[...]
    h = jnp.maximum(h, 0.0)

    # Fused block-diagonal layer 2: [TILE_B, 256] @ [256, 128] -> [actor h2 | critic h2]
    g = jnp.dot(h, w2_ref[...], preferred_element_type=jnp.float32) + b2_ref[...]
    g = jnp.maximum(g, 0.0)

    # Fused block-diagonal, zero-padded layer 3: [TILE_B, 128] @ [128, 128]
    #   cols [0, output_dim)   -> actor logits
    #   col  output_dim        -> critic value
    #   cols (output_dim, 128) -> exactly 0 (w3/b3 pad columns are zero)
    z = jnp.dot(g, w3_ref[...], preferred_element_type=jnp.float32) + b3_ref[...]

    lane = lax.broadcasted_iota(jnp.int32, z.shape, dimension=1)
    actor_mask = lane < output_dim
    critic_mask = lane == output_dim

    # Numerically-stable softmax over the actor lanes only.
    neg_big = jnp.float32(-1e30)
    logits = jnp.where(actor_mask, z, neg_big)
    m = jnp.max(logits, axis=-1, keepdims=True)
    # No re-mask needed: exp(-1e30 - m) underflows to exactly 0.0 in f32.
    e = jnp.exp(logits - m)
    denom = jnp.sum(e, axis=-1, keepdims=True)
    # EUP vrcp + one Newton step: ~1e-7 relative error, off the VALU path.
    r = pl.reciprocal(denom, approx=True)
    r = r * (2.0 - denom * r)
    probs = e * r

    # probs is exactly 0 outside the actor lanes; z is exactly 0 on pad lanes.
    packed = probs + jnp.where(critic_mask, z, 0.0)
    out_ref[...] = packed.astype(out_ref.dtype)


def pack_params(p):
    """Fuse the two heads' weights into block-concatenated / block-diagonal slabs."""
    output_dim = p["w3a"].shape[1]
    assert output_dim + 1 <= OUT_LANES

    w1 = jnp.concatenate([p["w1a"], p["w1c"]], axis=1)            # [in, 256]
    b1 = jnp.concatenate([p["b1a"], p["b1c"]], axis=1)            # [1, 256]

    w2 = jnp.zeros((2 * H1, 2 * H2), jnp.float32)                 # [256, 128]
    w2 = w2.at[:H1, :H2].set(p["w2a"]).at[H1:, H2:].set(p["w2c"])
    b2 = jnp.concatenate([p["b2a"], p["b2c"]], axis=1)            # [1, 128]

    w3 = jnp.zeros((2 * H2, OUT_LANES), jnp.float32)              # [128, 128]
    w3 = w3.at[:H2, :output_dim].set(p["w3a"])
    w3 = w3.at[H2:, output_dim:output_dim + 1].set(p["w3c"])
    b3 = jnp.zeros((1, OUT_LANES), jnp.float32)                   # [1, 128]
    b3 = b3.at[:, :output_dim].set(p["b3a"])
    b3 = b3.at[:, output_dim:output_dim + 1].set(p["b3c"])

    return dict(w1=w1, b1=b1, w2=w2, b2=b2, w3=w3, b3=b3)


def _choose_tiling(B, input_dim, weight_bytes, tile_b=None):
    """Pick (tile_b, padded_batch) so that:
       * padding waste is < 8 rows per grid step (not up to a whole tile),
       * the grid has >=2 steps (>=4 for large batches) for v7x's 2 TensorCores,
       * the VMEM working set — counted with the lane-padded x footprint —
         stays well inside the 32 MiB scoped limit on every generation."""
    b8 = _round_up(max(B, 1), 8)

    if tile_b is not None:
        tile_b = max(_round_up(tile_b, 8), 8)
        return tile_b, _round_up(b8, tile_b)

    in_lanes = _round_up(input_dim, 128)        # x pads to 128 lanes in VMEM
    # f32 bytes per row: double-buffered x + out slabs plus the fused h/g/z
    # temporaries inside the kernel body.
    per_row_bytes = 4 * (2 * in_lanes + 2 * OUT_LANES + (2 * H1 + 2 * H2 + OUT_LANES))
    vmem_budget = 24 * 1024 * 1024 - 2 * weight_bytes   # headroom under 32 MiB scoped
    max_tile = min(MAX_TILE_B, max(vmem_budget // per_row_bytes, 8))
    max_tile = max((max_tile // 8) * 8, 8)

    n_steps = pl.cdiv(b8, max_tile)
    if b8 >= 4 * 512:
        n_steps = max(n_steps, 4)   # >=2 steps per TensorCore on v7x megacore
    elif b8 > 8:
        n_steps = max(n_steps, 2)   # at least one step per TensorCore

    tile_b = _round_up(pl.cdiv(b8, n_steps), 8)
    b_pad = n_steps * tile_b        # waste < 8 * n_steps rows
    return tile_b, b_pad


def actor_critic_forward(x, packed, output_dim, *, tile_b=None):
    """x: [B, input_dim] f32. packed: output of pack_params. Returns (actor, critic)."""
    B, input_dim = x.shape

    w1, b1 = packed["w1"], packed["b1"]
    w2, b2 = packed["w2"], packed["b2"]
    w3, b3 = packed["w3"], packed["b3"]
    weight_bytes = 4 * int(w1.size + b1.size + w2.size + b2.size + w3.size + b3.size)

    tile_b, b_pad = _choose_tiling(B, input_dim, weight_bytes, tile_b)
    if b_pad != B:
        x = jnp.pad(x, ((0, b_pad - B), (0, 0)))

    def const_spec(a):
        # Full-extent block, constant index_map -> stays VMEM-resident across grid steps.
        return pl.BlockSpec(tuple(a.shape), lambda i: (0,) * a.ndim)

    flops = 2 * b_pad * (input_dim * (2 * H1) + (2 * H1) * (2 * H2)
                         + (2 * H2) * OUT_LANES)
    bytes_accessed = 4 * b_pad * (input_dim + OUT_LANES) + weight_bytes

    out_slab = pl.pallas_call(
        functools.partial(actor_critic_kernel, output_dim=output_dim),
        out_shape=jax.ShapeDtypeStruct((b_pad, OUT_LANES), jnp.float32),
        grid_spec=pltpu.PrefetchScalarGridSpec(
            num_scalar_prefetch=0,
            grid=(b_pad // tile_b,),
            in_specs=[
                pl.BlockSpec((tile_b, input_dim), lambda i: (i, 0)),
                const_spec(w1), const_spec(b1),
                const_spec(w2), const_spec(b2),
                const_spec(w3), const_spec(b3),
            ],
            out_specs=pl.BlockSpec((tile_b, OUT_LANES), lambda i: (i, 0)),
        ),
        compiler_params=pltpu.CompilerParams(
            dimension_semantics=("parallel",),
            vmem_limit_bytes=32 * 1024 * 1024,
        ),
        cost_estimate=pl.CostEstimate(
            flops=int(flops),
            transcendentals=int(b_pad * OUT_LANES),
            bytes_accessed=int(bytes_accessed),
        ),
    )(x, w1, b1, w2, b2, w3, b3)

    actor = out_slab[:B, :output_dim]
    critic = out_slab[:B, output_dim:output_dim + 1]
    return actor, critic


def init_params(input_dim, output_dim, seed=0):
    """Deterministic parameter init (synthetic; not a checkpoint load).
    Weight layout: [in_features, out_features]; bias layout: [1, out_features]."""
    keys = jax.random.split(jax.random.PRNGKey(seed), 12)

    def lin(kw, kb, fan_in, fan_out):
        bound = 1.0 / jnp.sqrt(fan_in)
        w = jax.random.uniform(kw, (fan_in, fan_out), jnp.float32, -bound, bound)
        b = jax.random.uniform(kb, (1, fan_out), jnp.float32, -bound, bound)
        return w, b

    w1a, b1a = lin(keys[0], keys[1], input_dim, H1)
    w2a, b2a = lin(keys[2], keys[3], H1, H2)
    w3a, b3a = lin(keys[4], keys[5], H2, output_dim)
    w1c, b1c = lin(keys[6], keys[7], input_dim, H1)
    w2c, b2c = lin(keys[8], keys[9], H1, H2)
    w3c, b3c = lin(keys[10], keys[11], H2, 1)
    return dict(
        w1a=w1a, b1a=b1a, w2a=w2a, b2a=b2a, w3a=w3a, b3a=b3a,
        w1c=w1c, b1c=b1c, w2c=w2c, b2c=b2c, w3c=w3c, b3c=b3c,
    )


def reference_forward(x, p):
    """Pure-JAX reference mirroring the PyTorch module."""
    h = jnp.maximum(x @ p["w1a"] + p["b1a"], 0.0)
    h = jnp.maximum(h @ p["w2a"] + p["b2a"], 0.0)
    logits = h @ p["w3a"] + p["b3a"]
    actor = jax.nn.softmax(logits, axis=-1)
    g = jnp.maximum(x @ p["w1c"] + p["b1c"], 0.0)
    g = jnp.maximum(g @ p["w2c"] + p["b2c"], 0.0)
    critic = g @ p["w3c"] + p["b3c"]
    return actor, critic


if __name__ == "__main__":
    INPUT_DIM = 32
    OUTPUT_DIM = 4
    BATCH = 2

    params = init_params(INPUT_DIM, OUTPUT_DIM, seed=0)
    packed = pack_params(params)
    x = jax.random.normal(jax.random.PRNGKey(0), (BATCH, INPUT_DIM), jnp.float32)

    actor_probs, critic_val = actor_critic_forward(x, packed, OUTPUT_DIM)
    jax.block_until_ready((actor_probs, critic_val))

    ref_actor, ref_critic = reference_forward(x, params)
    assert actor_probs.shape == (BATCH, OUTPUT_DIM)
    assert critic_val.shape == (BATCH, 1)
    assert jnp.allclose(actor_probs, ref_actor, atol=1e-5, rtol=1e-5)
    assert jnp.allclose(critic_val, ref_critic, atol=1e-5, rtol=1e-5)
    assert jnp.allclose(jnp.sum(actor_probs, axis=-1), 1.0, atol=1e-5)

    # Ragged, multi-tile batch (exercises the low-waste padding + 2-step grid).
    xb = jax.random.normal(jax.random.PRNGKey(1), (1030, INPUT_DIM), jnp.float32)
    a_big, c_big = actor_critic_forward(xb, packed, OUTPUT_DIM)
    jax.block_until_ready((a_big, c_big))
    ra, rc = reference_forward(xb, params)
    assert a_big.shape == (1030, OUTPUT_DIM) and c_big.shape == (1030, 1)
    assert jnp.allclose(a_big, ra, atol=1e-5, rtol=1e-5)
    assert jnp.allclose(c_big, rc, atol=1e-5, rtol=1e-5)

    # Larger ragged batch (exercises the >=4-step grid path).
    xc = jax.random.normal(jax.random.PRNGKey(2), (4100, INPUT_DIM), jnp.float32)
    a_4k, c_4k = actor_critic_forward(xc, packed, OUTPUT_DIM)
    jax.block_until_ready((a_4k, c_4k))
    ra4, rc4 = reference_forward(xc, params)
    assert a_4k.shape == (4100, OUTPUT_DIM) and c_4k.shape == (4100, 1)
    assert jnp.allclose(a_4k, ra4, atol=1e-5, rtol=1e-5)
    assert jnp.allclose(c_4k, rc4, atol=1e-5, rtol=1e-5)

    print("KERNEL_OK")
</pallas_src>

<mosaic_0001>
module attributes {stable_mosaic.version = 11 : i64} {
  func.func @actor_critic_kernel(%arg0: i32, %arg1: memref<8x32xf32, #tpu.memory_space<vmem>>, %arg2: memref<32x256xf32, #tpu.memory_space<vmem>>, %arg3: memref<1x256xf32, #tpu.memory_space<vmem>>, %arg4: memref<256x128xf32, #tpu.memory_space<vmem>>, %arg5: memref<1x128xf32, #tpu.memory_space<vmem>>, %arg6: memref<128x128xf32, #tpu.memory_space<vmem>>, %arg7: memref<1x128xf32, #tpu.memory_space<vmem>>, %arg8: memref<8x128xf32, #tpu.memory_space<vmem>>) attributes {dimension_semantics = [#tpu.dimension_semantics<parallel>], iteration_bounds = array<i64: 1>, scalar_prefetch = 0 : i64, scratch_operands = 0 : i64, tpu.core_type = #tpu.core_type<tc>, window_params = [{transform_indices = @transform_0, window_bounds = array<i64: 8, 32>}, {pipeline_mode = #tpu.pipeline_mode<synchronous>, transform_indices = @transform_1, window_bounds = array<i64: 32, 256>}, {pipeline_mode = #tpu.pipeline_mode<synchronous>, transform_indices = @transform_2, window_bounds = array<i64: 1, 256>}, {pipeline_mode = #tpu.pipeline_mode<synchronous>, transform_indices = @transform_3, window_bounds = array<i64: 256, 128>}, {pipeline_mode = #tpu.pipeline_mode<synchronous>, transform_indices = @transform_4, window_bounds = array<i64: 1, 128>}, {pipeline_mode = #tpu.pipeline_mode<synchronous>, transform_indices = @transform_5, window_bounds = array<i64: 128, 128>}, {pipeline_mode = #tpu.pipeline_mode<synchronous>, transform_indices = @transform_6, window_bounds = array<i64: 1, 128>}, {transform_indices = @transform_7, window_bounds = array<i64: 8, 128>}]} {
    %c0 = arith.constant 0 : index
    %c0_0 = arith.constant 0 : index
    %0 = vector.load %arg1[%c0, %c0_0] : memref<8x32xf32, #tpu.memory_space<vmem>>, vector<8x32xf32>
    %c0_1 = arith.constant 0 : index
    %c0_2 = arith.constant 0 : index
    %1 = vector.load %arg2[%c0_1, %c0_2] : memref<32x256xf32, #tpu.memory_space<vmem>>, vector<32x256xf32>
    %cst = arith.constant dense<0.000000e+00> : vector<8x256xf32>
    %2 = tpu.matmul %0, %1, %cst {dimension_numbers = #tpu.dot_dimension_numbers<[1], [0], [0], [1], [0, 0, 1, 1], [], []>} : vector<8x32xf32>, vector<32x256xf32>, vector<8x256xf32> -> vector<8x256xf32>
    %c0_3 = arith.constant 0 : index
    %c0_4 = arith.constant 0 : index
    %3 = vector.load %arg3[%c0_3, %c0_4] : memref<1x256xf32, #tpu.memory_space<vmem>>, vector<1x256xf32>
    %4 = vector.broadcast %3 : vector<1x256xf32> to vector<8x256xf32>
    %5 = arith.addf %2, %4 : vector<8x256xf32>
    %cst_5 = arith.constant 0.000000e+00 : f32
    %6 = vector.broadcast %cst_5 : f32 to vector<8x256xf32>
    %7 = arith.maximumf %5, %6 : vector<8x256xf32>
    %c0_6 = arith.constant 0 : index
    %c0_7 = arith.constant 0 : index
    %8 = vector.load %arg4[%c0_6, %c0_7] : memref<256x128xf32, #tpu.memory_space<vmem>>, vector<256x128xf32>
    %cst_8 = arith.constant dense<0.000000e+00> : vector<8x128xf32>
    %9 = tpu.matmul %7, %8, %cst_8 {dimension_numbers = #tpu.dot_dimension_numbers<[1], [0], [0], [1], [0, 0, 1, 1], [], []>} : vector<8x256xf32>, vector<256x128xf32>, vector<8x128xf32> -> vector<8x128xf32>
    %c0_9 = arith.constant 0 : index
    %c0_10 = arith.constant 0 : index
    %10 = vector.load %arg5[%c0_9, %c0_10] : memref<1x128xf32, #tpu.memory_space<vmem>>, vector<1x128xf32>
    %11 = vector.broadcast %10 : vector<1x128xf32> to vector<8x128xf32>
    %12 = arith.addf %9, %11 : vector<8x128xf32>
    %cst_11 = arith.constant 0.000000e+00 : f32
    %13 = vector.broadcast %cst_11 : f32 to vector<8x128xf32>
    %14 = arith.maximumf %12, %13 : vector<8x128xf32>
    %c0_12 = arith.constant 0 : index
    %c0_13 = arith.constant 0 : index
    %15 = vector.load %arg6[%c0_12, %c0_13] : memref<128x128xf32, #tpu.memory_space<vmem>>, vector<128x128xf32>
    %cst_14 = arith.constant dense<0.000000e+00> : vector<8x128xf32>
    %16 = tpu.matmul %14, %15, %cst_14 {dimension_numbers = #tpu.dot_dimension_numbers<[1], [0], [0], [1], [0, 0, 1, 1], [], []>} : vector<8x128xf32>, vector<128x128xf32>, vector<8x128xf32> -> vector<8x128xf32>
    %c0_15 = arith.constant 0 : index
    %c0_16 = arith.constant 0 : index
    %17 = vector.load %arg7[%c0_15, %c0_16] : memref<1x128xf32, #tpu.memory_space<vmem>>, vector<1x128xf32>
    %18 = vector.broadcast %17 : vector<1x128xf32> to vector<8x128xf32>
    %19 = arith.addf %16, %18 : vector<8x128xf32>
    %20 = tpu.iota {dimensions = array<i32: 1>} : vector<8x128xi32>
    %c4_i32 = arith.constant 4 : i32
    %21 = vector.broadcast %c4_i32 : i32 to vector<8x128xi32>
    %22 = arith.cmpi slt, %20, %21 : vector<8x128xi32>
    %c4_i32_17 = arith.constant 4 : i32
    %23 = vector.broadcast %c4_i32_17 : i32 to vector<8x128xi32>
    %24 = arith.cmpi eq, %20, %23 : vector<8x128xi32>
    %cst_18 = arith.constant -1.000000e+30 : f32
    %25 = vector.broadcast %cst_18 : f32 to vector<8x128xf32>
    %26 = arith.select %22, %19, %25 : vector<8x128xi1>, vector<8x128xf32>
    %cst_19 = arith.constant dense<0xFF800000> : vector<8xf32>
    %27 = vector.multi_reduction <maximumf>, %26, %cst_19 [1] : vector<8x128xf32> to vector<8xf32>
    %28 = vector.shape_cast %27 : vector<8xf32> to vector<8x1xf32>
    %29 = vector.broadcast %28 : vector<8x1xf32> to vector<8x128xf32>
    %30 = arith.subf %26, %29 : vector<8x128xf32>
    %31 = math.exp %30 : vector<8x128xf32>
    %cst_20 = arith.constant dense<0.000000e+00> : vector<8xf32>
    %32 = vector.multi_reduction <add>, %31, %cst_20 [1] : vector<8x128xf32> to vector<8xf32>
    %33 = vector.shape_cast %32 : vector<8xf32> to vector<8x1xf32>
    %34 = tpu.reciprocal %33 {approx = true} : vector<8x1xf32> -> vector<8x1xf32>
    %35 = arith.mulf %33, %34 : vector<8x1xf32>
    %cst_21 = arith.constant 2.000000e+00 : f32
    %36 = vector.broadcast %cst_21 : f32 to vector<8x1xf32>
    %37 = arith.subf %36, %35 : vector<8x1xf32>
    %38 = arith.mulf %34, %37 : vector<8x1xf32>
    %39 = vector.broadcast %38 : vector<8x1xf32> to vector<8x128xf32>
    %40 = arith.mulf %31, %39 : vector<8x128xf32>
    %cst_22 = arith.constant 0.000000e+00 : f32
    %41 = vector.broadcast %cst_22 : f32 to vector<8x128xf32>
    %42 = arith.select %24, %19, %41 : vector<8x128xi1>, vector<8x128xf32>
    %43 = arith.addf %40, %42 : vector<8x128xf32>
    %c0_23 = arith.constant 0 : index
    %c0_24 = arith.constant 0 : index
    %44 = vector.load %arg8[%c0_23, %c0_24] : memref<8x128xf32, #tpu.memory_space<vmem>>, vector<8x128xf32>
    tpu.vector_store %arg8[%c0_23, %c0_24], %43 {strides = array<i32>} : memref<8x128xf32, #tpu.memory_space<vmem>>, vector<8x128xf32>,
    return
  }
  func.func @transform_0(%arg0: i32) -> (i32, i32) {
    %c0_i32 = arith.constant 0 : i32
    %c0_i32_0 = arith.constant 0 : i32
    return %arg0, %c0_i32 : i32, i32
  }
  func.func @transform_1(%arg0: i32) -> (i32, i32) {
    %c0_i32 = arith.constant 0 : i32
    %c0_i32_0 = arith.constant 0 : i32
    %c0_i32_1 = arith.constant 0 : i32
    return %c0_i32, %c0_i32_0 : i32, i32
  }
  func.func @transform_2(%arg0: i32) -> (i32, i32) {
    %c0_i32 = arith.constant 0 : i32
    %c0_i32_0 = arith.constant 0 : i32
    %c0_i32_1 = arith.constant 0 : i32
    return %c0_i32, %c0_i32_0 : i32, i32
  }
  func.func @transform_3(%arg0: i32) -> (i32, i32) {
    %c0_i32 = arith.constant 0 : i32
    %c0_i32_0 = arith.constant 0 : i32
    %c0_i32_1 = arith.constant 0 : i32
    return %c0_i32, %c0_i32_0 : i32, i32
  }
  func.func @transform_4(%arg0: i32) -> (i32, i32) {
    %c0_i32 = arith.constant 0 : i32
    %c0_i32_0 = arith.constant 0 : i32
    %c0_i32_1 = arith.constant 0 : i32
    return %c0_i32, %c0_i32_0 : i32, i32
  }
  func.func @transform_5(%arg0: i32) -> (i32, i32) {
    %c0_i32 = arith.constant 0 : i32
    %c0_i32_0 = arith.constant 0 : i32
    %c0_i32_1 = arith.constant 0 : i32
    return %c0_i32, %c0_i32_0 : i32, i32
  }
  func.func @transform_6(%arg0: i32) -> (i32, i32) {
    %c0_i32 = arith.constant 0 : i32
    %c0_i32_0 = arith.constant 0 : i32
    %c0_i32_1 = arith.constant 0 : i32
    return %c0_i32, %c0_i32_0 : i32, i32
  }
  func.func @transform_7(%arg0: i32) -> (i32, i32) {
    %c0_i32 = arith.constant 0 : i32
    %c0_i32_0 = arith.constant 0 : i32
    return %arg0, %c0_i32 : i32, i32
  }
}

</mosaic_0001>

<llo_original>
// kernel: tpu_custom_call.1
$region0: #{tpu_custom_call.1}
  #allocation0 [shape = 'u32[]', space=smem, size = 0x4, offset = 0x4, fixed_abs, tag = 'smem constant byte address 0x4 - core index']
  #allocation1 [shape = 'u32[72,128]{1,0:T(1,128)}', space=vmem, size = 0x9000, scoped, tag = 'internal scratch']
  %s0 = inlined_call_operand.hbm [shape: f32[8,32], index: 0, kind: input, shape index: {}]
  %s1 = inlined_call_operand.hbm [shape: f32[32,256], index: 1, kind: input, shape index: {}]
  %s2 = inlined_call_operand.hbm [shape: f32[1,256], index: 2, kind: input, shape index: {}]
  %s3 = inlined_call_operand.hbm [shape: f32[256,128], index: 3, kind: input, shape index: {}]
  %s4 = inlined_call_operand.vmem [shape: f32[1,128], index: 4, kind: input, shape index: {}]
  %s5 = inlined_call_operand.hbm [shape: f32[128,128], index: 5, kind: input, shape index: {}]
  %s6 = inlined_call_operand.vmem [shape: f32[1,128], index: 6, kind: input, shape index: {}]
  %s7 = inlined_call_operand.hbm [shape: f32[8,128], index: 7, kind: output, shape index: {}]
  %s8 = sld [smem:[#allocation0]]
  $region58: #{tpu_custom_call.1} parent=0
    _
  %s10 = ssub.s32 1, %s8
  %s11 = scalar_select 0, %s10, %s8
  $region1: #{tpu_custom_call.1} parent=0
    #allocation2 [shape = 'u8[4096]{0}', space=vmem, size = 0x1000, scoped, tag = 'input window, operand 0, single buffered']
    #allocation3 [shape = 's32[1]{0}', space=sflag, size = 0x4, scoped, tag = 'scoped memory for tpu_custom_call.1']
    #allocation4 [shape = 's32[1]{0}', space=sflag, size = 0x4, scoped, tag = 'scoped memory for tpu_custom_call.1']
    #allocation5 [shape = 'u8[32768]{0}', space=vmem, size = 0x8000, scoped, tag = 'input window, operand 1, single buffered']
    #allocation6 [shape = 's32[1]{0}', space=sflag, size = 0x4, scoped, tag = 'scoped memory for tpu_custom_call.1']
    #allocation7 [shape = 'u8[1024]{0}', space=vmem, size = 0x400, scoped, tag = 'input window, operand 2, single buffered']
    #allocation8 [shape = 'u8[131072]{0}', space=vmem, size = 0x20000, scoped, tag = 'input window, operand 3, single buffered']
    #allocation9 [shape = 's32[1]{0}', space=sflag, size = 0x4, scoped, tag = 'scoped memory for tpu_custom_call.1']
    #allocation10 [shape = 'u8[65536]{0}', space=vmem, size = 0x10000, scoped, tag = 'input window, operand 5, single buffered']
    #allocation11 [shape = 'u8[4096]{0}', space=vmem, size = 0x1000, scoped, tag = 'output window, operand 0, single buffered']
    %12 = vsyncpa [#allocation3], 0
    %13 = vsyncpa [#allocation6], 0
    %14 = vsyncpa [#allocation9], 0
    %15 = vsyncpa [#allocation4], 0
    // Predicated region
    $region2: #{tpu_custom_call.1} parent=1 // pred_check
      _
    $region3: #{tpu_custom_call.1} parent=1 // pred_check_branch
      %17 = sbr.rel (0) target = $region5
    $region4: #{tpu_custom_call.1} parent=1 // pred_region
      %19 = vsyncadd [#allocation3], 0
      %s21 = sshll.u32 %s0, 4
      %s22 = int_to_ptr.hbm [resolvable:$true] %s21
      %s23 = sshll.u32 [#allocation2], 4
      %s24 = int_to_ptr.vmem [resolvable:$true] %s23
      %26 = dma.hbm_to_vmem [thread:$0]  %s22, 128, %s24, [#allocation3]
    $region5: #{tpu_custom_call.1} parent=1 // pred_fallthru
      _
    // Predicated region
    $region6: #{tpu_custom_call.1} parent=1 // pred_check
      _
    $region7: #{tpu_custom_call.1} parent=1 // pred_check_branch
      %28 = sbr.rel (0) target = $region9
    $region8: #{tpu_custom_call.1} parent=1 // pred_region
      %30 = vsyncadd [#allocation6], 0
      %s31 = sshll.u32 %s1, 4
      %s32 = int_to_ptr.hbm [resolvable:$true] %s31
      %s33 = sshll.u32 [#allocation5], 4
      %s34 = int_to_ptr.vmem [resolvable:$true] %s33
      %39 = dma.hbm_to_vmem [thread:$0]  %s32, 1024, %s34, [#allocation6], 256, 256, 16
    $region9: #{tpu_custom_call.1} parent=1 // pred_fallthru
      _
    // Predicated region
    $region10: #{tpu_custom_call.1} parent=1 // pred_check
      _
    $region11: #{tpu_custom_call.1} parent=1 // pred_check_branch
      %41 = sbr.rel (0) target = $region13
    $region12: #{tpu_custom_call.1} parent=1 // pred_region
      %43 = vsyncadd [#allocation6], 0
      %s45 = sshll.u32 %s2, 4
      %s46 = int_to_ptr.hbm [resolvable:$true] %s45
      %s47 = sshll.u32 [#allocation7], 4
      %s48 = int_to_ptr.vmem [resolvable:$true] %s47
      %50 = dma.hbm_to_vmem [thread:$0]  %s46, 32, %s48, [#allocation6]
    $region13: #{tpu_custom_call.1} parent=1 // pred_fallthru
      _
    // Predicated region
    $region14: #{tpu_custom_call.1} parent=1 // pred_check
      _
    $region15: #{tpu_custom_call.1} parent=1 // pred_check_branch
      %52 = sbr.rel (0) target = $region17
    $region16: #{tpu_custom_call.1} parent=1 // pred_region
      %54 = vsyncadd [#allocation9], 0
      %s55 = sshll.u32 %s3, 4
      %s56 = int_to_ptr.hbm [resolvable:$true] %s55
      %s57 = sshll.u32 [#allocation8], 4
      %s58 = int_to_ptr.vmem [resolvable:$true] %s57
      %63 = dma.hbm_to_vmem [thread:$0]  %s56, 4096, %s58, [#allocation9], 128, 128, 8
    $region17: #{tpu_custom_call.1} parent=1 // pred_fallthru
      _
    // Predicated region
    $region18: #{tpu_custom_call.1} parent=1 // pred_check
      _
    $region19: #{tpu_custom_call.1} parent=1 // pred_check_branch
      %65 = sbr.rel (0) target = $region21
    $region20: #{tpu_custom_call.1} parent=1 // pred_region
      _
    $region21: #{tpu_custom_call.1} parent=1 // pred_fallthru
      _
    // Predicated region
    $region22: #{tpu_custom_call.1} parent=1 // pred_check
      _
    $region23: #{tpu_custom_call.1} parent=1 // pred_check_branch
      %67 = sbr.rel (0) target = $region25
    $region24: #{tpu_custom_call.1} parent=1 // pred_region
      %69 = vsyncadd [#allocation9], 0
      %s70 = sshll.u32 %s5, 4
      %s71 = int_to_ptr.hbm [resolvable:$true] %s70
      %s72 = sshll.u32 [#allocation10], 4
      %s73 = int_to_ptr.vmem [resolvable:$true] %s72
      %78 = dma.hbm_to_vmem [thread:$0]  %s71, 2048, %s73, [#allocation9], 128, 128, 8
    $region25: #{tpu_custom_call.1} parent=1 // pred_fallthru
      _
    // Predicated region
    $region26: #{tpu_custom_call.1} parent=1 // pred_check
      _
    $region27: #{tpu_custom_call.1} parent=1 // pred_check_branch
      %80 = sbr.rel (0) target = $region29
    $region28: #{tpu_custom_call.1} parent=1 // pred_region
      _
    $region29: #{tpu_custom_call.1} parent=1 // pred_fallthru
      _
    // Predicated region
    $region30: #{tpu_custom_call.1} parent=1 // pred_check
      _
    $region31: #{tpu_custom_call.1} parent=1 // pred_check_branch
      %82 = sbr.rel (0) target = $region33
    $region32: #{tpu_custom_call.1} parent=1 // pred_region
      %84 = dma.done [#allocation3], 128
    $region33: #{tpu_custom_call.1} parent=1 // pred_fallthru
      _
    // Predicated region
    $region34: #{tpu_custom_call.1} parent=1 // pred_check
      _
    $region35: #{tpu_custom_call.1} parent=1 // pred_check_branch
      %86 = sbr.rel (0) target = $region37
    $region36: #{tpu_custom_call.1} parent=1 // pred_region
      %88 = dma.done [#allocation6], 1024
    $region37: #{tpu_custom_call.1} parent=1 // pred_fallthru
      _
    // Predicated region
    $region38: #{tpu_custom_call.1} parent=1 // pred_check
      _
    $region39: #{tpu_custom_call.1} parent=1 // pred_check_branch
      %90 = sbr.rel (0) target = $region41
    $region40: #{tpu_custom_call.1} parent=1 // pred_region
      %92 = dma.done [#allocation6], 32
    $region41: #{tpu_custom_call.1} parent=1 // pred_fallthru
      _
    // Predicated region
    $region42: #{tpu_custom_call.1} parent=1 // pred_check
      _
    $region43: #{tpu_custom_call.1} parent=1 // pred_check_branch
      %94 = sbr.rel (0) target = $region45
    $region44: #{tpu_custom_call.1} parent=1 // pred_region
      %96 = dma.done [#allocation9], 4096
    $region45: #{tpu_custom_call.1} parent=1 // pred_fallthru
      _
    // Predicated region
    $region46: #{tpu_custom_call.1} parent=1 // pred_check
      _
    $region47: #{tpu_custom_call.1} parent=1 // pred_check_branch
      %98 = sbr.rel (0) target = $region49
    $region48: #{tpu_custom_call.1} parent=1 // pred_region
      %100 = dma.done [#allocation9], 2048
    $region49: #{tpu_custom_call.1} parent=1 // pred_fallthru
      _
    %v101 = vld [vmem:[#allocation2] sm:$0xff]
    %v102 = vld [vmem:[#allocation5] sm:$0xff]
    %v103 = vld [vmem:[#allocation5 + $0x8] sm:$0xff]
    %v104 = vld [vmem:[#allocation5 + $0x10] sm:$0xff]
    %v105 = vld [vmem:[#allocation5 + $0x18] sm:$0xff]
    %v106 = vld [vmem:[#allocation5 + $0x20] sm:$0xff]
    %v107 = vld [vmem:[#allocation5 + $0x28] sm:$0xff]
    %v108 = vld [vmem:[#allocation5 + $0x30] sm:$0xff]
    %v109 = vld [vmem:[#allocation5 + $0x38] sm:$0xff]
    %v110 = vld [vmem:[#allocation7] sm:$0x3]
    %v112 = vperm.slane %v110, 0
    %v113 = vperm.slane %v110, 1
    %vm116 = vcmask 261120
    %v118 = vsel %vm116, %v101, 0
    %120 = vmatpush.msra.mxu0 0.0
    %121 = vmatpush.msra.mxu0 0.0
    %122 = vmatpush.msra.mxu0 0.0
    %123 = vmatpush.msra.mxu0 0.0
    %124 = vmatpush.msra.mxu0 0.0
    %125 = vmatpush.msra.mxu0 0.0
    %126 = vmatpush.msra.mxu0 0.0
    %127 = vmatpush.msra.mxu0 0.0
    %128 = vmatpush.msra.mxu0 0.0
    %129 = vmatpush.msra.mxu0 0.0
    %130 = vmatpush.msra.mxu0 0.0
    %131 = vmatpush.msra.mxu0 0.0
    %132 = vmatpush.msra.mxu0 %v108
    %133 = vmatpush.msra.mxu0 %v106
    %134 = vmatpush.msra.mxu0 %v104
    %135 = vmatpush.msra.mxu0 %v102
    %136 = vmatmul.f32.gmra.mxu0 %v118
    %v137 = vpop.f32.mrf.mxu0
    %v138 = vadd.f32 %v112, %v137
    %139 = vdwg.mxu0
    %140 = vmatpush.msra.mxu0 0.0
    %141 = vmatpush.msra.mxu0 0.0
    %142 = vmatpush.msra.mxu0 0.0
    %143 = vmatpush.msra.mxu0 0.0
    %144 = vmatpush.msra.mxu0 0.0
    %145 = vmatpush.msra.mxu0 0.0
    %146 = vmatpush.msra.mxu0 0.0
    %147 = vmatpush.msra.mxu0 0.0
    %148 = vmatpush.msra.mxu0 0.0
    %149 = vmatpush.msra.mxu0 0.0
    %150 = vmatpush.msra.mxu0 0.0
    %151 = vmatpush.msra.mxu0 0.0
    %152 = vmatpush.msra.mxu0 %v109
    %153 = vmatpush.msra.mxu0 %v107
    %154 = vmatpush.msra.mxu0 %v105
    %155 = vmatpush.msra.mxu0 %v103
    %156 = vmatmul.f32.gmra.mxu0 %v118
    %v157 = vpop.f32.mrf.mxu0
    %v158 = vadd.f32 %v113, %v157
    %159 = vdwg.mxu0
    %v160 = vmax.f32 %v138, 0.0
    %v161 = vmax.f32 %v158, 0.0
    %v162 = vld [vmem:[#allocation8] sm:$0xff]
    %v163 = vld [vmem:[#allocation8 + $0x8] sm:$0xff]
    %v164 = vld [vmem:[#allocation8 + $0x10] sm:$0xff]
    %v165 = vld [vmem:[#allocation8 + $0x18] sm:$0xff]
    %v166 = vld [vmem:[#allocation8 + $0x20] sm:$0xff]
    %v167 = vld [vmem:[#allocation8 + $0x28] sm:$0xff]
    %v168 = vld [vmem:[#allocation8 + $0x30] sm:$0xff]
    %v169 = vld [vmem:[#allocation8 + $0x38] sm:$0xff]
    %v170 = vld [vmem:[#allocation8 + $0x40] sm:$0xff]
    %v171 = vld [vmem:[#allocation8 + $0x48] sm:$0xff]
    %v172 = vld [vmem:[#allocation8 + $0x50] sm:$0xff]
    %v173 = vld [vmem:[#allocation8 + $0x58] sm:$0xff]
    %v174 = vld [vmem:[#allocation8 + $0x60] sm:$0xff]
    %v175 = vld [vmem:[#allocation8 + $0x68] sm:$0xff]
    %v176 = vld [vmem:[#allocation8 + $0x70] sm:$0xff]
    %v177 = vld [vmem:[#allocation8 + $0x78] sm:$0xff]
    %v178 = vld [vmem:[#allocation8 + $0x80] sm:$0xff]
    %v179 = vld [vmem:[#allocation8 + $0x88] sm:$0xff]
    %v180 = vld [vmem:[#allocation8 + $0x90] sm:$0xff]
    %v181 = vld [vmem:[#allocation8 + $0x98] sm:$0xff]
    %v182 = vld [vmem:[#allocation8 + $0xa0] sm:$0xff]
    %v183 = vld [vmem:[#allocation8 + $0xa8] sm:$0xff]
    %v184 = vld [vmem:[#allocation8 + $0xb0] sm:$0xff]
    %v185 = vld [vmem:[#allocation8 + $0xb8] sm:$0xff]
    %v186 = vld [vmem:[#allocation8 + $0xc0] sm:$0xff]
    %v187 = vld [vmem:[#allocation8 + $0xc8] sm:$0xff]
    %v188 = vld [vmem:[#allocation8 + $0xd0] sm:$0xff]
    %v189 = vld [vmem:[#allocation8 + $0xd8] sm:$0xff]
    %v190 = vld [vmem:[#allocation8 + $0xe0] sm:$0xff]
    %v191 = vld [vmem:[#allocation8 + $0xe8] sm:$0xff]
    %v192 = vld [vmem:[#allocation8 + $0xf0] sm:$0xff]
    %v193 = vld [vmem:[#allocation8 + $0xf8] sm:$0xff]
    %v194 = vld [vmem:[%s4] sm:$0x1]
    %v196 = vperm.slane %v194, 0
    %198 = vmatpush.msra.mxu0 %v177
    %199 = vmatpush.msra.mxu0 %v176
    %200 = vmatpush.msra.mxu0 %v175
    %201 = vmatpush.msra.mxu0 %v174
    %202 = vmatpush.msra.mxu0 %v173
    %203 = vmatpush.msra.mxu0 %v172
    %204 = vmatpush.msra.mxu0 %v171
    %205 = vmatpush.msra.mxu0 %v170
    %206 = vmatpush.msra.mxu0 %v169
    %207 = vmatpush.msra.mxu0 %v168
    %208 = vmatpush.msra.mxu0 %v167
    %209 = vmatpush.msra.mxu0 %v166
    %210 = vmatpush.msra.mxu0 %v165
    %211 = vmatpush.msra.mxu0 %v164
    %212 = vmatpush.msra.mxu0 %v163
    %213 = vmatpush.msra.mxu0 %v162
    %214 = vmatmul.f32.gmra.mxu0 %v160
    %v215 = vpop.f32.mrf.mxu0
    %v216 = vadd.f32 %v196, %v215
    %217 = vdwg.mxu0
    %218 = vmatpush.msra.mxu0 %v193
    %219 = vmatpush.msra.mxu0 %v192
    %220 = vmatpush.msra.mxu0 %v191
    %221 = vmatpush.msra.mxu0 %v190
    %222 = vmatpush.msra.mxu0 %v189
    %223 = vmatpush.msra.mxu0 %v188
    %224 = vmatpush.msra.mxu0 %v187
    %225 = vmatpush.msra.mxu0 %v186
    %226 = vmatpush.msra.mxu0 %v185
    %227 = vmatpush.msra.mxu0 %v184
    %228 = vmatpush.msra.mxu0 %v183
    %229 = vmatpush.msra.mxu0 %v182
    %230 = vmatpush.msra.mxu0 %v181
    %231 = vmatpush.msra.mxu0 %v180
    %232 = vmatpush.msra.mxu0 %v179
    %233 = vmatpush.msra.mxu0 %v178
    %234 = vmatmul.f32.gmra.mxu0 %v161
    %v235 = vpop.f32.mrf.mxu0
    %v236 = vadd.f32 %v216, %v235
    %237 = vdwg.mxu0
    %v238 = vmax.f32 %v236, 0.0
    %v239 = vld [vmem:[#allocation10] sm:$0xff]
    %v240 = vld [vmem:[#allocation10 + $0x8] sm:$0xff]
    %v241 = vld [vmem:[#allocation10 + $0x10] sm:$0xff]
    %v242 = vld [vmem:[#allocation10 + $0x18] sm:$0xff]
    %v243 = vld [vmem:[#allocation10 + $0x20] sm:$0xff]
    %v244 = vld [vmem:[#allocation10 + $0x28] sm:$0xff]
    %v245 = vld [vmem:[#allocation10 + $0x30] sm:$0xff]
    %v246 = vld [vmem:[#allocation10 + $0x38] sm:$0xff]
    %v247 = vld [vmem:[#allocation10 + $0x40] sm:$0xff]
    %v248 = vld [vmem:[#allocation10 + $0x48] sm:$0xff]
    %v249 = vld [vmem:[#allocation10 + $0x50] sm:$0xff]
    %v250 = vld [vmem:[#allocation10 + $0x58] sm:$0xff]
    %v251 = vld [vmem:[#allocation10 + $0x60] sm:$0xff]
    %v252 = vld [vmem:[#allocation10 + $0x68] sm:$0xff]
    %v253 = vld [vmem:[#allocation10 + $0x70] sm:$0xff]
    %v254 = vld [vmem:[#allocation10 + $0x78] sm:$0xff]
    %v255 = vld [vmem:[%s6] sm:$0x1]
    %v257 = vperm.slane %v255, 0
    %259 = vmatpush.msra.mxu0 %v254
    %260 = vmatpush.msra.mxu0 %v253
    %261 = vmatpush.msra.mxu0 %v252
    %262 = vmatpush.msra.mxu0 %v251
    %263 = vmatpush.msra.mxu0 %v250
    %264 = vmatpush.msra.mxu0 %v249
    %265 = vmatpush.msra.mxu0 %v248
    %266 = vmatpush.msra.mxu0 %v247
    %267 = vmatpush.msra.mxu0 %v246
    %268 = vmatpush.msra.mxu0 %v245
    %269 = vmatpush.msra.mxu0 %v244
    %270 = vmatpush.msra.mxu0 %v243
    %271 = vmatpush.msra.mxu0 %v242
    %272 = vmatpush.msra.mxu0 %v241
    %273 = vmatpush.msra.mxu0 %v240
    %274 = vmatpush.msra.mxu0 %v239
    %275 = vmatmul.f32.gmra.mxu0 %v238
    %v276 = vpop.f32.mrf.mxu0
    %v277 = vadd.f32 %v257, %v276
    %278 = vdwg.mxu0
    %v279 = vlaneseq
    %v280 = vand.u32 %v279, 127
    %vm281 = vcmp.lt.s32.totalorder %v280, 4
    %vm282 = vcmp.eq.s32.totalorder %v280, 4
    %v283 = vsel %vm281, %v277, -1e+30
    %284 = vmax.xlane.f32.xlu0 %v283
    %v285 = vpop.xlane.xlu0 %284
    %v286 = vsub.f32 %v283, %v285
    %v287 = vmul.f32 %v286, 1.442695
    %v288 = vpow.pop %v287
    %289 = vadd.xlane.f32.xlu0 %v288
    %v290 = vpop.xlane.xlu0 %289
    %v291 = vrcp.pop %v290
    %v292 = vmul.f32 %v290, %v291
    %v293 = vsub.f32 2.0, %v292
    %v294 = vmul.f32 %v291, %v293
    %v295 = vmul.f32 %v288, %v294
    %v296 = vsel %vm282, %v277, 0.0
    %v297 = vadd.f32 %v295, %v296
    %298 = vst [vmem:[#allocation11] sm:$0xff] %v297
    // Predicated region
    $region50: #{tpu_custom_call.1} parent=1 // pred_check
      _
    $region51: #{tpu_custom_call.1} parent=1 // pred_check_branch
      %300 = sbr.rel (0) target = $region53
    $region52: #{tpu_custom_call.1} parent=1 // pred_region
      %302 = vsyncadd [#allocation4], 0
      %s304 = sshll.u32 [#allocation11], 4
      %s305 = int_to_ptr.vmem [resolvable:$true] %s304
      %s306 = sshll.u32 %s7, 4
      %s307 = int_to_ptr.hbm [resolvable:$true] %s306
      %309 = dma.vmem_to_hbm [thread:$0]  %s305, 128, %s307, [#allocation4]
    $region53: #{tpu_custom_call.1} parent=1 // pred_fallthru
      _
    // Predicated region
    $region54: #{tpu_custom_call.1} parent=1 // pred_check
      _
    $region55: #{tpu_custom_call.1} parent=1 // pred_check_branch
      %311 = sbr.rel (0) target = $region57
    $region56: #{tpu_custom_call.1} parent=1 // pred_region
      %313 = dma.done [#allocation4], 128
    $region57: #{tpu_custom_call.1} parent=1 // pred_fallthru
      _
    %314 = vsyncpa [#allocation3], 1
    %315 = vsyncpa [#allocation6], 1
    %316 = vsyncpa [#allocation9], 1
    %317 = vsyncpa [#allocation4], 1

</llo_original>
